<compile_context>
chip_gen: v6e
topology: v6e:2x2x1
jax: 0.10.0
libtpu: 0.0.40
codegen_flags: <defaults>
</compile_context>

<pallas_src>
import functools

import jax
import jax.numpy as jnp
from jax import lax
from jax.experimental import pallas as pl
from jax.experimental.pallas import tpu as pltpu


def _tsm_kernel(x_ref, o_ref, *, fold):
    """One grid step: full time axis, full channels, one lane tile of h*w."""
    x = x_ref[...]                        # (1, T, c, hw_tile)
    _, T, c, hw = x.shape

    zero_t = jnp.zeros((1, 1, c, hw), dtype=x.dtype)
    # Time-shifted views built along the major (untiled) T axis: these are
    # cheap block copies in VMEM, no cross-lane (XLU) work.  The zero slice
    # concatenated at the edge implements the boundary zeroing directly.
    x_next = jnp.concatenate([x[:, 1:], zero_t], axis=1)       # x[t+1], 0 at t=T-1
    x_prev = jnp.concatenate([zero_t, x[:, : T - 1]], axis=1)  # x[t-1], 0 at t=0

    # Block spans the FULL channel dim, so a block-local iota is correct.
    # (If channel tiling is ever added, this iota must be offset by the
    #  channel block start.)
    ch = lax.broadcasted_iota(jnp.int32, (1, T, c, hw), 2)

    # out[:, :-1, :fold]       = x[:, 1:, :fold]         -> x_next
    # out[:, 1:,  fold:2*fold] = x[:, :-1, fold:2*fold]  -> x_prev
    # out[:, :,   2*fold:]     = x[:, :,  2*fold:]       -> x
    o_ref[...] = jnp.where(ch < fold, x_next,
                           jnp.where(ch < 2 * fold, x_prev, x))


def tsm_forward(x, n_segment=10, fold_div=3, target_block_bytes=1 << 20):
    """x: (nt, c, h, w) -> (nt, c, h, w), matching PyTorch TSM.forward."""
    nt, c, h, w = x.shape
    assert nt % n_segment == 0, "nt must be a multiple of n_segment"
    n_batch = nt // n_segment
    hw = h * w
    fold = c // fold_div
    itemsize = jnp.dtype(x.dtype).itemsize

    xr = x.reshape(n_batch, n_segment, c, hw)

    # Choose the lane (h*w) tile: use the full extent unless the per-batch
    # slab exceeds the VMEM budget, in which case split it into the largest
    # multiple-of-128 divisor of hw that fits the target block size.
    hw_tile = hw
    if hw % 128 == 0:
        n128 = hw // 128
        per_lane_block = n_segment * c * 128 * itemsize
        for cand in range(n128, 0, -1):
            if n128 % cand == 0 and cand * per_lane_block <= target_block_bytes:
                hw_tile = 128 * cand
                break
        else:
            hw_tile = 128  # even a single 128-lane tile exceeds target; use minimum
    n_hw = hw // hw_tile

    blk = (1, n_segment, c, hw_tile)
    kernel = functools.partial(_tsm_kernel, fold=fold)

    out = pl.pallas_call(
        kernel,
        out_shape=jax.ShapeDtypeStruct((n_batch, n_segment, c, hw), x.dtype),
        grid_spec=pltpu.PrefetchScalarGridSpec(
            num_scalar_prefetch=0,
            grid=(n_batch, n_hw),
            in_specs=[pl.BlockSpec(blk, lambda b, j: (b, 0, 0, j))],
            out_specs=pl.BlockSpec(blk, lambda b, j: (b, 0, 0, j)),
        ),
        compiler_params=pltpu.CompilerParams(
            dimension_semantics=("parallel", "parallel"),
        ),
    )(xr)

    return out.reshape(nt, c, h, w)


def tsm_reference(x, n_segment=10, fold_div=3):
    """Pure-JAX reference mirroring the PyTorch code."""
    nt, c, h, w = x.shape
    n_batch = nt // n_segment
    xr = x.reshape(n_batch, n_segment, c, h, w)
    fold = c // fold_div
    out = jnp.zeros_like(xr)
    out = out.at[:, :-1, :fold].set(xr[:, 1:, :fold])
    out = out.at[:, 1:, fold:2 * fold].set(xr[:, :-1, fold:2 * fold])
    out = out.at[:, :, 2 * fold:].set(xr[:, :, 2 * fold:])
    return out.reshape(nt, c, h, w)


if __name__ == "__main__":
    n_segment, fold_div = 10, 3
    n_batch, c, h, w = 2, 12, 16, 16
    nt = n_batch * n_segment

    key = jax.random.PRNGKey(0)
    x = jax.random.normal(key, (nt, c, h, w), dtype=jnp.float32)

    ref = tsm_reference(x, n_segment=n_segment, fold_div=fold_div)

    # Default path: one full (T, c, h*w) slab per batch per grid step.
    out = jax.block_until_ready(
        tsm_forward(x, n_segment=n_segment, fold_div=fold_div))
    assert out.shape == (nt, c, h, w)
    assert jnp.array_equal(out, ref), "Pallas TSM mismatch vs reference (untiled hw)"

    # Force the lane-tiled path (h*w split into 128-wide tiles) to exercise it.
    out_tiled = jax.block_until_ready(
        tsm_forward(x, n_segment=n_segment, fold_div=fold_div,
                    target_block_bytes=64 << 10))
    assert jnp.array_equal(out_tiled, ref), "Pallas TSM mismatch vs reference (tiled hw)"

    print("KERNEL_OK")
</pallas_src>

<mosaic_0001>
module attributes {stable_mosaic.version = 11 : i64} {
  func.func @_tsm_kernel(%arg0: i32, %arg1: i32, %arg2: memref<1x10x12x256xf32, #tpu.memory_space<vmem>>, %arg3: memref<1x10x12x256xf32, #tpu.memory_space<vmem>>) attributes {dimension_semantics = [#tpu.dimension_semantics<parallel>, #tpu.dimension_semantics<parallel>], iteration_bounds = array<i64: 2, 1>, scalar_prefetch = 0 : i64, scratch_operands = 0 : i64, tpu.core_type = #tpu.core_type<tc>, window_params = [{transform_indices = @transform_0, window_bounds = array<i64: 1, 10, 12, 256>}, {transform_indices = @transform_1, window_bounds = array<i64: 1, 10, 12, 256>}]} {
    %c0 = arith.constant 0 : index
    %c0_0 = arith.constant 0 : index
    %c0_1 = arith.constant 0 : index
    %c0_2 = arith.constant 0 : index
    %0 = vector.load %arg2[%c0, %c0_0, %c0_1, %c0_2] : memref<1x10x12x256xf32, #tpu.memory_space<vmem>>, vector<1x10x12x256xf32>
    %cst = arith.constant 0.000000e+00 : f32
    %1 = vector.broadcast %cst : f32 to vector<1x1x12x256xf32>
    %2 = vector.extract_strided_slice %0 {offsets = [0, 1, 0, 0], sizes = [1, 9, 12, 256], strides = [1, 1, 1, 1]} : vector<1x10x12x256xf32> to vector<1x9x12x256xf32>
    %3 = tpu.concatenate %2, %1 in 1 : vector<1x9x12x256xf32>, vector<1x1x12x256xf32> -> vector<1x10x12x256xf32>
    %4 = vector.extract_strided_slice %0 {offsets = [0, 0, 0, 0], sizes = [1, 9, 12, 256], strides = [1, 1, 1, 1]} : vector<1x10x12x256xf32> to vector<1x9x12x256xf32>
    %5 = tpu.concatenate %1, %4 in 1 : vector<1x1x12x256xf32>, vector<1x9x12x256xf32> -> vector<1x10x12x256xf32>
    %6 = tpu.iota {dimensions = array<i32: 2>} : vector<1x10x12x256xi32>
    %c4_i32 = arith.constant 4 : i32
    %7 = vector.broadcast %c4_i32 : i32 to vector<1x10x12x256xi32>
    %8 = arith.cmpi slt, %6, %7 : vector<1x10x12x256xi32>
    %c8_i32 = arith.constant 8 : i32
    %9 = vector.broadcast %c8_i32 : i32 to vector<1x10x12x256xi32>
    %10 = arith.cmpi slt, %6, %9 : vector<1x10x12x256xi32>
    %11 = arith.select %10, %5, %0 : vector<1x10x12x256xi1>, vector<1x10x12x256xf32>
    %12 = arith.select %8, %3, %11 : vector<1x10x12x256xi1>, vector<1x10x12x256xf32>
    %c0_3 = arith.constant 0 : index
    %c0_4 = arith.constant 0 : index
    %c0_5 = arith.constant 0 : index
    %c0_6 = arith.constant 0 : index
    %13 = vector.load %arg3[%c0_3, %c0_4, %c0_5, %c0_6] : memref<1x10x12x256xf32, #tpu.memory_space<vmem>>, vector<1x10x12x256xf32>
    tpu.vector_store %arg3[%c0_3, %c0_4, %c0_5, %c0_6], %12 {strides = array<i32>} : memref<1x10x12x256xf32, #tpu.memory_space<vmem>>, vector<1x10x12x256xf32>,
    return
  }
  func.func @transform_0(%arg0: i32, %arg1: i32) -> (i32, i32, i32, i32) {
    %c0_i32 = arith.constant 0 : i32
    %c0_i32_0 = arith.constant 0 : i32
    %c0_i32_1 = arith.constant 0 : i32
    return %arg0, %c0_i32, %c0_i32_0, %arg1 : i32, i32, i32, i32
  }
  func.func @transform_1(%arg0: i32, %arg1: i32) -> (i32, i32, i32, i32) {
    %c0_i32 = arith.constant 0 : i32
    %c0_i32_0 = arith.constant 0 : i32
    %c0_i32_1 = arith.constant 0 : i32
    return %arg0, %c0_i32, %c0_i32_0, %arg1 : i32, i32, i32, i32
  }
}

</mosaic_0001>

<llo_original>
// kernel: tpu_custom_call.1
$region0: #{tpu_custom_call.1}
  #allocation0 [shape = 'u32[]', space=smem, size = 0x4, offset = 0x4, fixed_abs, tag = 'smem constant byte address 0x4 - core index']
  #allocation1 [shape = 'u32[144,128]{1,0:T(1,128)}', space=vmem, size = 0x12000, scoped, tag = 'internal scratch']
  %s0 = inlined_call_operand.vmem [shape: f32[2,10,12,256], index: 0, kind: input, shape index: {}]
  %s1 = inlined_call_operand.vmem [shape: f32[2,10,12,256], index: 1, kind: output, shape index: {}]
  %s2 = sld [smem:[#allocation0]]
  $region37: #{tpu_custom_call.1} parent=0
    _
  %s4 = ssub.s32 1, %s2
  %s5 = scalar_select 0, %s4, %s2
  loop: start=0, step=1, limit=4
  $region2: #{tpu_custom_call.1} parent=0 // loop_pre_header
    _
  $region3: #{tpu_custom_call.1} parent=0 // loop_header
    %s7 = sphi 0, %s11
    %p8 = scmp.ge.s32.totalorder %s7, 4
    %s14 = sphi 0, %s26
    %s15 = sphi 0, %s22
    %s16 = sphi 0, %s14
    %s17 = sphi 0, %s15
    %s18 = sphi 0, %s16
    %s19 = sphi 0, %s17
    %s31 = sphi 0, %s33
    %s34 = sphi 0, %s31
    %s35 = sphi 0, %s34
    %s51 = sphi 0, %s35
    %s59 = sphi 0, %s61
    %s62 = sphi 0, %s59
    %s63 = sphi 0, %s62
    %s79 = sphi 0, %s63
  $region4: #{tpu_custom_call.1} parent=0 // loop_header_branch
    %10 = sbr.rel (%p8) target = $region8
  $region5: #{tpu_custom_call.1} parent=0 // loop_body
    %s12 = ssub.s32 %s7, 1
    %s13 = ssub.s32 %s7, 2
    %s20 = sadd.s32 1, %s15
    %p21 = scmp.ge.s32.totalorder %s20, 1
    %s22 = scalar_select %p21, 0, %s20
    %s23 = sadd.s32 1, %s14
    %s24 = scalar_select %p21, %s23, %s14
    %p25 = scmp.ge.s32.totalorder %s24, 2
    %s26 = scalar_select %p25, 0, %s24
    %s27 = ssub.s32 %s14, %s26
    %s28 = ssub.s32 %s15, %s22
    %s29 = sor.u32 %s27, %s28
    %p30 = scmp.eq.s32.totalorder %s29, 0
    %s32 = sadd.s32 %s31, 1
    %s33 = scalar_select %p30, %s31, %s32
    %p36 = pneg %p30
    %p37 = scmp.eq.s32.totalorder %s7, 1
    %p38 = por %p36, %p37
    %p39 = scmp.ne.s32.totalorder %s31, %s34
    %p40 = scmp.eq.s32.totalorder %s7, 0
    %p41 = por %p39, %p40
    %p42 = scmp.ne.s32.totalorder %s31, %s34
    %p43 = scmp.eq.s32.totalorder %s12, 1
    %p44 = por %p42, %p43
    %p45 = scmp.ne.s32.totalorder %s34, %s35
    %p46 = scmp.eq.s32.totalorder %s12, 0
    %p47 = por %p45, %p46
    %p48 = scmp.ne.s32.totalorder %s34, %s35
    %p49 = scmp.eq.s32.totalorder %s13, 1
    %p50 = por %p48, %p49
    %p52 = scmp.ne.s32.totalorder %s35, %s51
    %p53 = scmp.eq.s32.totalorder %s13, 0
    %p54 = por %p52, %p53
    %s55 = ssub.s32 %s14, %s26
    %s56 = ssub.s32 %s15, %s22
    %s57 = sor.u32 %s55, %s56
    %p58 = scmp.eq.s32.totalorder %s57, 0
    %s60 = sadd.s32 %s59, 1
    %s61 = scalar_select %p58, %s59, %s60
    %p64 = pneg %p58
    %p65 = scmp.eq.s32.totalorder %s7, 1
    %p66 = por %p64, %p65
    %p67 = scmp.ne.s32.totalorder %s59, %s62
    %p68 = scmp.eq.s32.totalorder %s7, 0
    %p69 = por %p67, %p68
    %p70 = scmp.ne.s32.totalorder %s59, %s62
    %p71 = scmp.eq.s32.totalorder %s12, 1
    %p72 = por %p70, %p71
    %p73 = scmp.ne.s32.totalorder %s62, %s63
    %p74 = scmp.eq.s32.totalorder %s12, 0
    %p75 = por %p73, %p74
    %p76 = scmp.ne.s32.totalorder %s62, %s63
    %p77 = scmp.eq.s32.totalorder %s13, 1
    %p78 = por %p76, %p77
    %p80 = scmp.ne.s32.totalorder %s63, %s79
    %p81 = scmp.eq.s32.totalorder %s13, 0
    %p82 = por %p80, %p81
    %p83 = scmp.le.s32.totalorder 1, %s7
    %p84 = scmp.lt.s32.totalorder %s7, 3
    %p85 = pnand %p83, %p84
    %p86 = pneg %p85
    // Predicated region
    $region9: #{tpu_custom_call.1} parent=5 // pred_check
      _
    $region10: #{tpu_custom_call.1} parent=5 // pred_check_branch
      %88 = sbr.rel (%p85) target = $region12
    $region11: #{tpu_custom_call.1} parent=5 // pred_region
      %s89 = ssub.s32 %s7, 1
    $region12: #{tpu_custom_call.1} parent=5 // pred_fallthru
      _
    %p90 = scmp.lt.s32.totalorder %s7, 2
    // Predicated region
    $region13: #{tpu_custom_call.1} parent=5 // pred_check
      %p91 = pneg %p90
    $region14: #{tpu_custom_call.1} parent=5 // pred_check_branch
      %93 = sbr.rel (%p91) target = $region16
    $region15: #{tpu_custom_call.1} parent=5 // pred_region
      // Predicated region
      $region17: #{tpu_custom_call.1} parent=15 // pred_check
        %p94 = pneg %p41
      $region18: #{tpu_custom_call.1} parent=15 // pred_check_branch
        %96 = sbr.rel (%p94) target = $region20
      $region19: #{tpu_custom_call.1} parent=15 // pred_region
        %s97 = smul.u32 2, %s15
        %p98 = scmp.lt.s32.totalorder %s14, 1
        %s99 = scalar_select %p98, %s14, 1
        %p100 = scmp.lt.s32.totalorder %s97, 1
        %s101 = scalar_select %p100, %s97, 1
        %s102 = smul.addr %s99, 40
        %s103 = sadd.s32 %s101, %s102
        %s104 = smul.addr %s103, 8
        %s105 = scalar_lea.vmem %s0, %s104
        %s106 = smul.u32 2, %s15
      $region20: #{tpu_custom_call.1} parent=15 // pred_fallthru
        _
    $region16: #{tpu_custom_call.1} parent=5 // pred_fallthru
      _
    %p107 = scmp.le.s32.totalorder 1, %s7
    %p108 = scmp.lt.s32.totalorder %s7, 3
    %p109 = pnand %p107, %p108
    %p110 = pneg %p109
    // Predicated region
    $region21: #{tpu_custom_call.1} parent=5 // pred_check
      _
    $region22: #{tpu_custom_call.1} parent=5 // pred_check_branch
      %112 = sbr.rel (%p109) target = $region24
    $region23: #{tpu_custom_call.1} parent=5 // pred_region
      %s113 = ssub.s32 %s7, 1
      %s114 = smul.u32 2, %s17
      %p115 = scmp.lt.s32.totalorder %s16, 1
      %s116 = scalar_select %p115, %s16, 1
      %p117 = scmp.lt.s32.totalorder %s114, 1
      %s118 = scalar_select %p117, %s114, 1
      %s119 = smul.addr %s116, 40
      %s120 = sadd.s32 %s118, %s119
      %s121 = smul.addr %s120, 8
      %s122 = scalar_lea.vmem %s0, %s121
      %p123 = pneg %p47
      %p124 = pneg %p44
      %p125 = pneg %p75
      %p126 = pneg %p72
      %s127 = smul.u32 2, %s17
      %p128 = scmp.lt.s32.totalorder %s16, 1
      %s129 = scalar_select %p128, %s16, 1
      %p130 = scmp.lt.s32.totalorder %s127, 1
      %s131 = scalar_select %p130, %s127, 1
      %s132 = smul.addr %s129, 40
      %s133 = sadd.s32 %s131, %s132
      %s134 = smul.addr %s133, 8
      %s135 = scalar_lea.vmem %s1, %s134
      %s136 = smul.u32 2, %s17
      %p137 = scmp.lt.s32.totalorder %s16, 1
      %s138 = scalar_select %p137, %s16, 1
      %p139 = scmp.lt.s32.totalorder %s136, 1
      %s140 = scalar_select %p139, %s136, 1
      %s141 = smul.addr %s138, 40
      %s142 = sadd.s32 %s140, %s141
      %s143 = smul.addr %s142, 8
      %s144 = scalar_lea.vmem %s0, %s143
      %s145 = smul.u32 2, %s17
      %s146 = smul.u32 2, %s17
      %p147 = scmp.lt.s32.totalorder %s16, 1
      %s148 = scalar_select %p147, %s16, 1
      %p149 = scmp.lt.s32.totalorder %s146, 1
      %s150 = scalar_select %p149, %s146, 1
      %s151 = smul.addr %s148, 40
      %s152 = sadd.s32 %s150, %s151
      %s153 = smul.addr %s152, 8
      %s154 = scalar_lea.vmem %s1, %s153
      %s155 = smul.u32 2, %s17
      %v156 = vld [vmem:[%s144] sm:$0xff]
      %v157 = vld [vmem:[%s144 + $0x8] sm:$0xff]
      %v158 = vld [vmem:[%s144 + $0x10] sm:$0xf]
      %v159 = vld [vmem:[%s144 + $0x18] sm:$0xf]
      %v160 = vld [vmem:[%s144 + $0x20] sm:$0xff]
      %v161 = vld [vmem:[%s144 + $0x28] sm:$0xff]
      %v162 = vld [vmem:[%s144 + $0x30] sm:$0xf]
      %v163 = vld [vmem:[%s144 + $0x38] sm:$0xf]
      %v164 = vld [vmem:[%s144 + $0x40] sm:$0xff]
      %v165 = vld [vmem:[%s144 + $0x48] sm:$0xff]
      %v166 = vld [vmem:[%s144 + $0x50] sm:$0xf]
      %v167 = vld [vmem:[%s144 + $0x58] sm:$0xf]
      %v168 = vld [vmem:[%s144 + $0x60] sm:$0xff]
      %v169 = vld [vmem:[%s144 + $0x68] sm:$0xff]
      %v170 = vld [vmem:[%s144 + $0x70] sm:$0xf]
      %v171 = vld [vmem:[%s144 + $0x78] sm:$0xf]
      %v172 = vld [vmem:[%s144 + $0x80] sm:$0xff]
      %v173 = vld [vmem:[%s144 + $0x88] sm:$0xff]
      %v174 = vld [vmem:[%s144 + $0x90] sm:$0xf]
      %v175 = vld [vmem:[%s144 + $0x98] sm:$0xf]
      %v176 = vld [vmem:[%s144 + $0xa0] sm:$0xff]
      %v177 = vld [vmem:[%s144 + $0xa8] sm:$0xff]
      %v178 = vld [vmem:[%s144 + $0xb0] sm:$0xf]
      %v179 = vld [vmem:[%s144 + $0xb8] sm:$0xf]
      %v180 = vld [vmem:[%s144 + $0xc0] sm:$0xff]
      %v181 = vld [vmem:[%s144 + $0xc8] sm:$0xff]
      %v182 = vld [vmem:[%s144 + $0xd0] sm:$0xf]
      %v183 = vld [vmem:[%s144 + $0xd8] sm:$0xf]
      %v184 = vld [vmem:[%s144 + $0xe0] sm:$0xff]
      %v185 = vld [vmem:[%s144 + $0xe8] sm:$0xff]
      %v186 = vld [vmem:[%s144 + $0xf0] sm:$0xf]
      %v187 = vld [vmem:[%s144 + $0xf8] sm:$0xf]
      %v188 = vld [vmem:[%s144 + $0x100] sm:$0xff]
      %v189 = vld [vmem:[%s144 + $0x108] sm:$0xff]
      %v190 = vld [vmem:[%s144 + $0x110] sm:$0xf]
      %v191 = vld [vmem:[%s144 + $0x118] sm:$0xf]
      %v192 = vld [vmem:[%s144 + $0x120] sm:$0xff]
      %v193 = vld [vmem:[%s144 + $0x128] sm:$0xff]
      %v194 = vld [vmem:[%s144 + $0x130] sm:$0xf]
      %v195 = vld [vmem:[%s144 + $0x138] sm:$0xf]
      %v196 = vlaneseq
      %v197 = vshrl.u32 %v196, 7
      %v198 = vadd.s32 %v197, 8
      %vm199 = vcmp.lt.s32.totalorder %v197, 4
      %vm200 = vcmp.lt.s32.totalorder %v198, 4
      %vm201 = vcmp.lt.s32.totalorder %v197, 8
      %vm202 = vcmp.lt.s32.totalorder %v198, 8
      %v203 = vsel %vm201, 0.0, %v156
      %v204 = vsel %vm201, 0.0, %v157
      %v205 = vsel %vm202, 0.0, %v158
      %v206 = vsel %vm202, 0.0, %v159
      %v207 = vsel %vm201, %v156, %v160
      %v208 = vsel %vm201, %v157, %v161
      %v209 = vsel %vm202, %v158, %v162
      %v210 = vsel %vm202, %v159, %v163
      %v211 = vsel %vm201, %v160, %v164
      %v212 = vsel %vm201, %v161, %v165
      %v213 = vsel %vm202, %v162, %v166
      %v214 = vsel %vm202, %v163, %v167
      %v215 = vsel %vm201, %v164, %v168
      %v216 = vsel %vm201, %v165, %v169
      %v217 = vsel %vm202, %v166, %v170
      %v218 = vsel %vm202, %v167, %v171
      %v219 = vsel %vm201, %v168, %v172
      %v220 = vsel %vm201, %v169, %v173
      %v221 = vsel %vm202, %v170, %v174
      %v222 = vsel %vm202, %v171, %v175
      %v223 = vsel %vm201, %v172, %v176
      %v224 = vsel %vm201, %v173, %v177
      %v225 = vsel %vm202, %v174, %v178
      %v226 = vsel %vm202, %v175, %v179
      %v227 = vsel %vm201, %v176, %v180
      %v228 = vsel %vm201, %v177, %v181
      %v229 = vsel %vm202, %v178, %v182
      %v230 = vsel %vm202, %v179, %v183
      %v231 = vsel %vm201, %v180, %v184
      %v232 = vsel %vm201, %v181, %v185
      %v233 = vsel %vm202, %v182, %v186
      %v234 = vsel %vm202, %v183, %v187
      %v235 = vsel %vm201, %v184, %v188
      %v236 = vsel %vm201, %v185, %v189
      %v237 = vsel %vm202, %v186, %v190
      %v238 = vsel %vm202, %v187, %v191
      %v239 = vsel %vm201, %v188, %v192
      %v240 = vsel %vm201, %v189, %v193
      %v241 = vsel %vm202, %v190, %v194
      %v242 = vsel %vm202, %v191, %v195
      %v243 = vsel %vm199, %v160, %v203
      %v244 = vsel %vm199, %v161, %v204
      %v245 = vsel %vm200, %v162, %v205
      %v246 = vsel %vm200, %v163, %v206
      %v247 = vsel %vm199, %v164, %v207
      %v248 = vsel %vm199, %v165, %v208
      %v249 = vsel %vm200, %v166, %v209
      %v250 = vsel %vm200, %v167, %v210
      %v251 = vsel %vm199, %v168, %v211
      %v252 = vsel %vm199, %v169, %v212
      %v253 = vsel %vm200, %v170, %v213
      %v254 = vsel %vm200, %v171, %v214
      %v255 = vsel %vm199, %v172, %v215
      %v256 = vsel %vm199, %v173, %v216
      %v257 = vsel %vm200, %v174, %v217
      %v258 = vsel %vm200, %v175, %v218
      %v259 = vsel %vm199, %v176, %v219
      %v260 = vsel %vm199, %v177, %v220
      %v261 = vsel %vm200, %v178, %v221
      %v262 = vsel %vm200, %v179, %v222
      %v263 = vsel %vm199, %v180, %v223
      %v264 = vsel %vm199, %v181, %v224
      %v265 = vsel %vm200, %v182, %v225
      %v266 = vsel %vm200, %v183, %v226
      %v267 = vsel %vm199, %v184, %v227
      %v268 = vsel %vm199, %v185, %v228
      %v269 = vsel %vm200, %v186, %v229
      %v270 = vsel %vm200, %v187, %v230
      %v271 = vsel %vm199, %v188, %v231
      %v272 = vsel %vm199, %v189, %v232
      %v273 = vsel %vm200, %v190, %v233
      %v274 = vsel %vm200, %v191, %v234
      %v275 = vsel %vm199, %v192, %v235
      %v276 = vsel %vm199, %v193, %v236
      %v277 = vsel %vm200, %v194, %v237
      %v278 = vsel %vm200, %v195, %v238
      %v279 = vsel %vm199, 0.0, %v239
      %v280 = vsel %vm199, 0.0, %v240
      %v281 = vsel %vm200, 0.0, %v241
      %v282 = vsel %vm200, 0.0, %v242
      %283 = vst [vmem:[%s154] sm:$0xff] %v243
      %284 = vst [vmem:[%s154 + $0x8] sm:$0xff] %v244
      %285 = vst [vmem:[%s154 + $0x10] sm:$0xf] %v245
      %286 = vst [vmem:[%s154 + $0x18] sm:$0xf] %v246
      %287 = vst [vmem:[%s154 + $0x20] sm:$0xff] %v247
      %288 = vst [vmem:[%s154 + $0x28] sm:$0xff] %v248
      %289 = vst [vmem:[%s154 + $0x30] sm:$0xf] %v249
      %290 = vst [vmem:[%s154 + $0x38] sm:$0xf] %v250
      %291 = vst [vmem:[%s154 + $0x40] sm:$0xff] %v251
      %292 = vst [vmem:[%s154 + $0x48] sm:$0xff] %v252
      %293 = vst [vmem:[%s154 + $0x50] sm:$0xf] %v253
      %294 = vst [vmem:[%s154 + $0x58] sm:$0xf] %v254
      %295 = vst [vmem:[%s154 + $0x60] sm:$0xff] %v255
      %296 = vst [vmem:[%s154 + $0x68] sm:$0xff] %v256
      %297 = vst [vmem:[%s154 + $0x70] sm:$0xf] %v257
      %298 = vst [vmem:[%s154 + $0x78] sm:$0xf] %v258
      %299 = vst [vmem:[%s154 + $0x80] sm:$0xff] %v259
      %300 = vst [vmem:[%s154 + $0x88] sm:$0xff] %v260
      %301 = vst [vmem:[%s154 + $0x90] sm:$0xf] %v261
      %302 = vst [vmem:[%s154 + $0x98] sm:$0xf] %v262
      %303 = vst [vmem:[%s154 + $0xa0] sm:$0xff] %v263
      %304 = vst [vmem:[%s154 + $0xa8] sm:$0xff] %v264
      %305 = vst [vmem:[%s154 + $0xb0] sm:$0xf] %v265
      %306 = vst [vmem:[%s154 + $0xb8] sm:$0xf] %v266
      %307 = vst [vmem:[%s154 + $0xc0] sm:$0xff] %v267
      %308 = vst [vmem:[%s154 + $0xc8] sm:$0xff] %v268
      %309 = vst [vmem:[%s154 + $0xd0] sm:$0xf] %v269
      %310 = vst [vmem:[%s154 + $0xd8] sm:$0xf] %v270
      %311 = vst [vmem:[%s154 + $0xe0] sm:$0xff] %v271
      %312 = vst [vmem:[%s154 + $0xe8] sm:$0xff] %v272
      %313 = vst [vmem:[%s154 + $0xf0] sm:$0xf] %v273
      %314 = vst [vmem:[%s154 + $0xf8] sm:$0xf] %v274
      %315 = vst [vmem:[%s154 + $0x100] sm:$0xff] %v275
      %316 = vst [vmem:[%s154 + $0x108] sm:$0xff] %v276
      %317 = vst [vmem:[%s154 + $0x110] sm:$0xf] %v277
      %318 = vst [vmem:[%s154 + $0x118] sm:$0xf] %v278
      %319 = vst [vmem:[%s154 + $0x120] sm:$0xff] %v279
      %320 = vst [vmem:[%s154 + $0x128] sm:$0xff] %v280
      %321 = vst [vmem:[%s154 + $0x130] sm:$0xf] %v281
      %322 = vst [vmem:[%s154 + $0x138] sm:$0xf] %v282
      %s323 = smul.u32 2, %s17
      %p324 = scmp.lt.s32.totalorder %s16, 1
      %s325 = scalar_select %p324, %s16, 1
      %p326 = scmp.lt.s32.totalorder %s323, 1
      %s327 = scalar_select %p326, %s323, 1
      %s328 = smul.addr %s325, 40
      %s329 = sadd.s32 %s327, %s328
      %s330 = smul.addr %s329, 8
      %s331 = scalar_lea.vmem %s1, %s330
      // Predicated region
      $region25: #{tpu_custom_call.1} parent=23 // pred_check
        %p332 = pneg %p72
      $region26: #{tpu_custom_call.1} parent=23 // pred_check_branch
        %334 = sbr.rel (%p332) target = $region28
      $region27: #{tpu_custom_call.1} parent=23 // pred_region
        %s335 = smul.u32 2, %s17
      $region28: #{tpu_custom_call.1} parent=23 // pred_fallthru
        _
    $region24: #{tpu_custom_call.1} parent=5 // pred_fallthru
      _
    %p336 = scmp.le.s32.totalorder 2, %s7
    // Predicated region
    $region29: #{tpu_custom_call.1} parent=5 // pred_check
      %p337 = pneg %p336
    $region30: #{tpu_custom_call.1} parent=5 // pred_check_branch
      %339 = sbr.rel (%p337) target = $region32
    $region31: #{tpu_custom_call.1} parent=5 // pred_region
      %s340 = ssub.s32 %s7, 2
      // Predicated region
      $region33: #{tpu_custom_call.1} parent=31 // pred_check
        %p341 = pneg %p78
      $region34: #{tpu_custom_call.1} parent=31 // pred_check_branch
        %343 = sbr.rel (%p341) target = $region36
      $region35: #{tpu_custom_call.1} parent=31 // pred_region
        %s344 = smul.u32 2, %s19
        %p345 = scmp.lt.s32.totalorder %s18, 1
        %s346 = scalar_select %p345, %s18, 1
        %p347 = scmp.lt.s32.totalorder %s344, 1
        %s348 = scalar_select %p347, %s344, 1
        %s349 = smul.addr %s346, 40
        %s350 = sadd.s32 %s348, %s349
        %s351 = smul.addr %s350, 8
        %s352 = scalar_lea.vmem %s1, %s351
      $region36: #{tpu_custom_call.1} parent=31 // pred_fallthru
        _
    $region32: #{tpu_custom_call.1} parent=5 // pred_fallthru
      _
  $region6: #{tpu_custom_call.1} parent=0 // loop_footer
    %s11 = sadd.s32 1, %s7
  $region7: #{tpu_custom_call.1} parent=0 // loop_footer_branch
    %6 = sbr.rel target = $region3
  $region8: #{tpu_custom_call.1} parent=0 // loop_exit
    _

</llo_original>
